<compile_context>
chip_gen: v6e
topology: v6e:2x2x1
jax: 0.10.0
libtpu: 0.0.40
codegen_flags: <defaults>
</compile_context>

<pallas_src>
import functools

import jax
import jax.numpy as jnp
from jax.experimental import pallas as pl
from jax.experimental.pallas import tpu as pltpu


def make_decoder_kernel(n_layers, hid_dim, k_max):
    """Builds the Pallas kernel body for a given number of LSTM layers."""
    H = hid_dim

    def kernel(x_ref, h0_ref, c0_ref, w_emb_ref, b_emb_ref,
               w_lstm_ref, b_lstm_ref, w_fc_ref, b_fc_ref,
               pred_ref, h_out_ref, c_out_ref):
        # ---- embedding: Linear(output_dim -> emb_dim); dropout == identity ----
        emb = (jnp.dot(x_ref[...].astype(jnp.bfloat16), w_emb_ref[...],
                       preferred_element_type=jnp.float32)
               + b_emb_ref[...])

        layer_in = emb
        for l in range(n_layers):
            h_prev = h0_ref[l]          # (B, H) f32   (read BEFORE aliased write)
            c_prev = c0_ref[l]          # (B, H) f32

            # Fused input: [layer_in, h_prev]  -> one matmul against [W_ih; W_hh].
            xh = jnp.concatenate([layer_in, h_prev], axis=-1)
            pad = k_max - xh.shape[-1]
            if pad > 0:  # only needed if emb_dim != hid_dim (zero rows in weight)
                xh = jnp.concatenate(
                    [xh, jnp.zeros((xh.shape[0], pad), xh.dtype)], axis=-1)

            gates = (jnp.dot(xh.astype(jnp.bfloat16), w_lstm_ref[l],
                             preferred_element_type=jnp.float32)
                     + b_lstm_ref[l])                       # (B, 4H) f32

            # Full-width activations on the (B, 4H) vreg:
            #   sigmoid(x) = 0.5 * tanh(x/2) + 0.5   (EUP tanh, no divide)
            sig = 0.5 * jnp.tanh(0.5 * gates) + 0.5
            th = jnp.tanh(gates)
            lane = jax.lax.broadcasted_iota(jnp.int32, gates.shape, 1)
            is_g = (lane >= 2 * H) & (lane < 3 * H)
            acts = jnp.where(is_g, th, sig)

            # PyTorch gate order: input, forget, cell(g), output
            i_g = acts[:, 0 * H:1 * H]
            f_g = acts[:, 1 * H:2 * H]
            g_g = acts[:, 2 * H:3 * H]
            o_g = acts[:, 3 * H:4 * H]

            c_new = f_g * c_prev + i_g * g_g
            h_new = o_g * jnp.tanh(c_new)

            h_out_ref[l] = h_new
            c_out_ref[l] = c_new

            # Inter-layer dropout only applies in training; identity in eval.
            layer_in = h_new

        # ---- fc_out: Linear(hid_dim -> output_dim) ----
        pred_ref[...] = (jnp.dot(layer_in.astype(jnp.bfloat16), w_fc_ref[...],
                                 preferred_element_type=jnp.float32)
                         + b_fc_ref[...])

    return kernel


def pack_params(params, *, n_layers, emb_dim, hid_dim):
    """Host-side parameter prep: fuse W_ih/W_hh, pre-add biases, cast to bf16."""
    H = hid_dim
    k_max = max(emb_dim, hid_dim) + hid_dim
    w_stack, b_stack = [], []
    for l in range(n_layers):
        w_fused = jnp.concatenate(
            [params[f"w_ih_{l}"], params[f"w_hh_{l}"]], axis=0)   # (in+H, 4H)
        pad = k_max - w_fused.shape[0]
        if pad > 0:
            w_fused = jnp.concatenate(
                [w_fused, jnp.zeros((pad, 4 * H), w_fused.dtype)], axis=0)
        w_stack.append(w_fused)
        b_stack.append(params[f"b_ih_{l}"] + params[f"b_hh_{l}"])  # (1, 4H)
    packed = {
        "w_emb": params["w_emb"].astype(jnp.bfloat16),
        "b_emb": params["b_emb"],
        "w_fc": params["w_fc"].astype(jnp.bfloat16),
        "b_fc": params["b_fc"],
        "w_lstm": jnp.stack(w_stack).astype(jnp.bfloat16),  # (L, k_max, 4H) bf16
        "b_lstm": jnp.stack(b_stack),                       # (L, 1, 4H) f32
    }
    return packed, k_max


def decoder_forward(x, h0, c0, packed, *, n_layers, hid_dim, k_max):
    """Wrapper: one pallas_call, everything as a single VMEM-resident block."""
    B, output_dim = x.shape

    inputs = [x, h0, c0,
              packed["w_emb"], packed["b_emb"],
              packed["w_lstm"], packed["b_lstm"],
              packed["w_fc"], packed["b_fc"]]

    vmem_spec = pl.BlockSpec(memory_space=pltpu.MemorySpace.VMEM)

    out_shapes = (
        jax.ShapeDtypeStruct((B, output_dim), jnp.float32),      # prediction
        jax.ShapeDtypeStruct(h0.shape, jnp.float32),             # hidden
        jax.ShapeDtypeStruct(c0.shape, jnp.float32),             # cell
    )

    kernel = make_decoder_kernel(n_layers, hid_dim, k_max)

    return pl.pallas_call(
        kernel,
        out_shape=out_shapes,
        in_specs=[vmem_spec] * len(inputs),
        out_specs=(vmem_spec, vmem_spec, vmem_spec),
        # h0 -> hidden_out, c0 -> cell_out (state buffers reused across steps).
        input_output_aliases={1: 1, 2: 2},
    )(*inputs)


def decoder_reference(x, h0, c0, params, *, n_layers, hid_dim,
                      matmul_dtype=jnp.float32):
    """Pure-JAX reference matching PyTorch eval-mode semantics."""
    H = hid_dim

    def mm(a, w):
        return jnp.dot(a.astype(matmul_dtype), w.astype(matmul_dtype),
                       preferred_element_type=jnp.float32)

    emb = mm(x, params["w_emb"]) + params["b_emb"]
    layer_in = emb
    h_out, c_out = [], []
    for l in range(n_layers):
        gates = (mm(layer_in, params[f"w_ih_{l}"]) + params[f"b_ih_{l}"]
                 + mm(h0[l], params[f"w_hh_{l}"]) + params[f"b_hh_{l}"])
        i_g = jax.nn.sigmoid(gates[:, 0 * H:1 * H])
        f_g = jax.nn.sigmoid(gates[:, 1 * H:2 * H])
        g_g = jnp.tanh(gates[:, 2 * H:3 * H])
        o_g = jax.nn.sigmoid(gates[:, 3 * H:4 * H])
        c_new = f_g * c0[l] + i_g * g_g
        h_new = o_g * jnp.tanh(c_new)
        h_out.append(h_new)
        c_out.append(c_new)
        layer_in = h_new
    pred = mm(layer_in, params["w_fc"]) + params["b_fc"]
    return pred, jnp.stack(h_out), jnp.stack(c_out)


def init_params(key, output_dim, emb_dim, hid_dim, n_layers):
    keys = jax.random.split(key, 4 + 4 * n_layers)
    scale = 0.1
    params = {
        "w_emb": scale * jax.random.normal(keys[0], (output_dim, emb_dim), jnp.float32),
        "b_emb": scale * jax.random.normal(keys[1], (1, emb_dim), jnp.float32),
        "w_fc": scale * jax.random.normal(keys[2], (hid_dim, output_dim), jnp.float32),
        "b_fc": scale * jax.random.normal(keys[3], (1, output_dim), jnp.float32),
    }
    for l in range(n_layers):
        in_dim = emb_dim if l == 0 else hid_dim
        k = keys[4 + 4 * l: 8 + 4 * l]
        params[f"w_ih_{l}"] = scale * jax.random.normal(k[0], (in_dim, 4 * hid_dim), jnp.float32)
        params[f"w_hh_{l}"] = scale * jax.random.normal(k[1], (hid_dim, 4 * hid_dim), jnp.float32)
        params[f"b_ih_{l}"] = scale * jax.random.normal(k[2], (1, 4 * hid_dim), jnp.float32)
        params[f"b_hh_{l}"] = scale * jax.random.normal(k[3], (1, 4 * hid_dim), jnp.float32)
    return params


if __name__ == "__main__":
    # Shapes consistent with Decoder(output_dim, emb_dim, hid_dim, n_layers, dropout)
    batch = 8
    output_dim = 16
    emb_dim = 32
    hid_dim = 32
    n_layers = 2
    # dropout = 0.25  -> identity in eval mode (no RNG path needed)

    key = jax.random.PRNGKey(0)
    k_x, k_h, k_c, k_p = jax.random.split(key, 4)

    x = jax.random.normal(k_x, (batch, output_dim), jnp.float32)       # `input` (pre-unsqueeze)
    h0 = jax.random.normal(k_h, (n_layers, batch, hid_dim), jnp.float32)
    c0 = jax.random.normal(k_c, (n_layers, batch, hid_dim), jnp.float32)
    params = init_params(k_p, output_dim, emb_dim, hid_dim, n_layers)

    packed, k_max = pack_params(params, n_layers=n_layers,
                                emb_dim=emb_dim, hid_dim=hid_dim)

    fwd = jax.jit(functools.partial(decoder_forward, n_layers=n_layers,
                                    hid_dim=hid_dim, k_max=k_max))
    pred, h_new, c_new = fwd(x, h0, c0, packed)
    jax.block_until_ready((pred, h_new, c_new))

    # Tight check against a reference using the same bf16 matmul inputs.
    pred_b, h_b, c_b = decoder_reference(x, h0, c0, params, n_layers=n_layers,
                                         hid_dim=hid_dim,
                                         matmul_dtype=jnp.bfloat16)
    assert jnp.allclose(pred, pred_b, atol=2e-3), "prediction mismatch (bf16 ref)"
    assert jnp.allclose(h_new, h_b, atol=2e-3), "hidden mismatch (bf16 ref)"
    assert jnp.allclose(c_new, c_b, atol=2e-3), "cell mismatch (bf16 ref)"

    # Loose check against the full-f32 (PyTorch-equivalent) reference.
    pred_r, h_r, c_r = decoder_reference(x, h0, c0, params, n_layers=n_layers,
                                         hid_dim=hid_dim,
                                         matmul_dtype=jnp.float32)
    assert jnp.allclose(pred, pred_r, atol=3e-2), "prediction mismatch (f32 ref)"
    assert jnp.allclose(h_new, h_r, atol=3e-2), "hidden mismatch (f32 ref)"
    assert jnp.allclose(c_new, c_r, atol=3e-2), "cell mismatch (f32 ref)"

    print("KERNEL_OK")
</pallas_src>

<mosaic_0001>
module attributes {stable_mosaic.version = 11 : i64} {
  func.func @kernel(%arg0: memref<8x16xf32, #tpu.memory_space<vmem>>, %arg1: memref<2x8x32xf32, #tpu.memory_space<vmem>>, %arg2: memref<2x8x32xf32, #tpu.memory_space<vmem>>, %arg3: memref<16x32xbf16, #tpu.memory_space<vmem>>, %arg4: memref<1x32xf32, #tpu.memory_space<vmem>>, %arg5: memref<2x64x128xbf16, #tpu.memory_space<vmem>>, %arg6: memref<2x1x128xf32, #tpu.memory_space<vmem>>, %arg7: memref<32x16xbf16, #tpu.memory_space<vmem>>, %arg8: memref<1x16xf32, #tpu.memory_space<vmem>>, %arg9: memref<8x16xf32, #tpu.memory_space<vmem>>, %arg10: memref<2x8x32xf32, #tpu.memory_space<vmem>>, %arg11: memref<2x8x32xf32, #tpu.memory_space<vmem>>) attributes {dimension_semantics = [], scalar_prefetch = 0 : i64, scratch_operands = 0 : i64, tpu.core_type = #tpu.core_type<tc>} {
    %c0 = arith.constant 0 : index
    %c0_0 = arith.constant 0 : index
    %0 = vector.load %arg0[%c0, %c0_0] : memref<8x16xf32, #tpu.memory_space<vmem>>, vector<8x16xf32>
    %1 = arith.truncf %0 : vector<8x16xf32> to vector<8x16xbf16>
    %c0_1 = arith.constant 0 : index
    %c0_2 = arith.constant 0 : index
    %2 = vector.load %arg3[%c0_1, %c0_2] : memref<16x32xbf16, #tpu.memory_space<vmem>>, vector<16x32xbf16>
    %cst = arith.constant dense<0.000000e+00> : vector<8x32xf32>
    %3 = tpu.matmul %1, %2, %cst {dimension_numbers = #tpu.dot_dimension_numbers<[1], [0], [0], [1], [0, 0, 1, 1], [], []>} : vector<8x16xbf16>, vector<16x32xbf16>, vector<8x32xf32> -> vector<8x32xf32>
    %c0_3 = arith.constant 0 : index
    %c0_4 = arith.constant 0 : index
    %4 = vector.load %arg4[%c0_3, %c0_4] : memref<1x32xf32, #tpu.memory_space<vmem>>, vector<1x32xf32>
    %5 = vector.broadcast %4 : vector<1x32xf32> to vector<8x32xf32>
    %6 = arith.addf %3, %5 : vector<8x32xf32>
    %c0_5 = arith.constant 0 : index
    %c0_6 = arith.constant 0 : index
    %c0_7 = arith.constant 0 : index
    %7 = vector.load %arg1[%c0_5, %c0_6, %c0_7] : memref<2x8x32xf32, #tpu.memory_space<vmem>>, vector<1x8x32xf32>
    %8 = vector.shape_cast %7 : vector<1x8x32xf32> to vector<8x32xf32>
    %c0_8 = arith.constant 0 : index
    %c0_9 = arith.constant 0 : index
    %c0_10 = arith.constant 0 : index
    %9 = vector.load %arg2[%c0_8, %c0_9, %c0_10] : memref<2x8x32xf32, #tpu.memory_space<vmem>>, vector<1x8x32xf32>
    %10 = vector.shape_cast %9 : vector<1x8x32xf32> to vector<8x32xf32>
    %11 = tpu.concatenate %6, %8 in 1 : vector<8x32xf32>, vector<8x32xf32> -> vector<8x64xf32>
    %12 = arith.truncf %11 : vector<8x64xf32> to vector<8x64xbf16>
    %c0_11 = arith.constant 0 : index
    %c0_12 = arith.constant 0 : index
    %c0_13 = arith.constant 0 : index
    %13 = vector.load %arg5[%c0_11, %c0_12, %c0_13] : memref<2x64x128xbf16, #tpu.memory_space<vmem>>, vector<1x64x128xbf16>
    %14 = vector.shape_cast %13 : vector<1x64x128xbf16> to vector<64x128xbf16>
    %cst_14 = arith.constant dense<0.000000e+00> : vector<8x128xf32>
    %15 = tpu.matmul %12, %14, %cst_14 {dimension_numbers = #tpu.dot_dimension_numbers<[1], [0], [0], [1], [0, 0, 1, 1], [], []>} : vector<8x64xbf16>, vector<64x128xbf16>, vector<8x128xf32> -> vector<8x128xf32>
    %c0_15 = arith.constant 0 : index
    %c0_16 = arith.constant 0 : index
    %c0_17 = arith.constant 0 : index
    %16 = vector.load %arg6[%c0_15, %c0_16, %c0_17] : memref<2x1x128xf32, #tpu.memory_space<vmem>>, vector<1x1x128xf32>
    %17 = vector.shape_cast %16 : vector<1x1x128xf32> to vector<1x128xf32>
    %18 = vector.broadcast %17 : vector<1x128xf32> to vector<8x128xf32>
    %19 = arith.addf %15, %18 : vector<8x128xf32>
    %cst_18 = arith.constant 5.000000e-01 : f32
    %20 = vector.broadcast %cst_18 : f32 to vector<8x128xf32>
    %21 = arith.mulf %20, %19 : vector<8x128xf32>
    %22 = math.tanh %21 : vector<8x128xf32>
    %cst_19 = arith.constant 5.000000e-01 : f32
    %23 = vector.broadcast %cst_19 : f32 to vector<8x128xf32>
    %24 = arith.mulf %23, %22 : vector<8x128xf32>
    %cst_20 = arith.constant 5.000000e-01 : f32
    %25 = vector.broadcast %cst_20 : f32 to vector<8x128xf32>
    %26 = arith.addf %24, %25 : vector<8x128xf32>
    %27 = math.tanh %19 : vector<8x128xf32>
    %28 = tpu.iota {dimensions = array<i32: 1>} : vector<8x128xi32>
    %c64_i32 = arith.constant 64 : i32
    %29 = vector.broadcast %c64_i32 : i32 to vector<8x128xi32>
    %30 = arith.cmpi sge, %28, %29 : vector<8x128xi32>
    %c96_i32 = arith.constant 96 : i32
    %31 = vector.broadcast %c96_i32 : i32 to vector<8x128xi32>
    %32 = arith.cmpi slt, %28, %31 : vector<8x128xi32>
    %33 = arith.andi %30, %32 : vector<8x128xi1>
    %34 = arith.select %33, %27, %26 : vector<8x128xi1>, vector<8x128xf32>
    %35 = vector.extract_strided_slice %34 {offsets = [0, 0], sizes = [8, 32], strides = [1, 1]} : vector<8x128xf32> to vector<8x32xf32>
    %36 = vector.extract_strided_slice %34 {offsets = [0, 32], sizes = [8, 32], strides = [1, 1]} : vector<8x128xf32> to vector<8x32xf32>
    %37 = vector.extract_strided_slice %34 {offsets = [0, 64], sizes = [8, 32], strides = [1, 1]} : vector<8x128xf32> to vector<8x32xf32>
    %38 = vector.extract_strided_slice %34 {offsets = [0, 96], sizes = [8, 32], strides = [1, 1]} : vector<8x128xf32> to vector<8x32xf32>
    %39 = arith.mulf %36, %10 : vector<8x32xf32>
    %40 = arith.mulf %35, %37 : vector<8x32xf32>
    %41 = arith.addf %39, %40 : vector<8x32xf32>
    %42 = math.tanh %41 : vector<8x32xf32>
    %43 = arith.mulf %38, %42 : vector<8x32xf32>
    %c0_21 = arith.constant 0 : index
    %c0_22 = arith.constant 0 : index
    %c0_23 = arith.constant 0 : index
    %44 = vector.load %arg10[%c0_21, %c0_22, %c0_23] : memref<2x8x32xf32, #tpu.memory_space<vmem>>, vector<1x8x32xf32>
    %45 = vector.shape_cast %44 : vector<1x8x32xf32> to vector<8x32xf32>
    %46 = vector.shape_cast %43 : vector<8x32xf32> to vector<1x8x32xf32>
    tpu.vector_store %arg10[%c0_21, %c0_22, %c0_23], %46 {strides = array<i32>} : memref<2x8x32xf32, #tpu.memory_space<vmem>>, vector<1x8x32xf32>,
    %c0_24 = arith.constant 0 : index
    %c0_25 = arith.constant 0 : index
    %c0_26 = arith.constant 0 : index
    %47 = vector.load %arg11[%c0_24, %c0_25, %c0_26] : memref<2x8x32xf32, #tpu.memory_space<vmem>>, vector<1x8x32xf32>
    %48 = vector.shape_cast %47 : vector<1x8x32xf32> to vector<8x32xf32>
    %49 = vector.shape_cast %41 : vector<8x32xf32> to vector<1x8x32xf32>
    tpu.vector_store %arg11[%c0_24, %c0_25, %c0_26], %49 {strides = array<i32>} : memref<2x8x32xf32, #tpu.memory_space<vmem>>, vector<1x8x32xf32>,
    %c1 = arith.constant 1 : index
    %c0_27 = arith.constant 0 : index
    %c0_28 = arith.constant 0 : index
    %50 = vector.load %arg1[%c1, %c0_27, %c0_28] : memref<2x8x32xf32, #tpu.memory_space<vmem>>, vector<1x8x32xf32>
    %51 = vector.shape_cast %50 : vector<1x8x32xf32> to vector<8x32xf32>
    %c1_29 = arith.constant 1 : index
    %c0_30 = arith.constant 0 : index
    %c0_31 = arith.constant 0 : index
    %52 = vector.load %arg2[%c1_29, %c0_30, %c0_31] : memref<2x8x32xf32, #tpu.memory_space<vmem>>, vector<1x8x32xf32>
    %53 = vector.shape_cast %52 : vector<1x8x32xf32> to vector<8x32xf32>
    %54 = tpu.concatenate %43, %51 in 1 : vector<8x32xf32>, vector<8x32xf32> -> vector<8x64xf32>
    %55 = arith.truncf %54 : vector<8x64xf32> to vector<8x64xbf16>
    %c1_32 = arith.constant 1 : index
    %c0_33 = arith.constant 0 : index
    %c0_34 = arith.constant 0 : index
    %56 = vector.load %arg5[%c1_32, %c0_33, %c0_34] : memref<2x64x128xbf16, #tpu.memory_space<vmem>>, vector<1x64x128xbf16>
    %57 = vector.shape_cast %56 : vector<1x64x128xbf16> to vector<64x128xbf16>
    %cst_35 = arith.constant dense<0.000000e+00> : vector<8x128xf32>
    %58 = tpu.matmul %55, %57, %cst_35 {dimension_numbers = #tpu.dot_dimension_numbers<[1], [0], [0], [1], [0, 0, 1, 1], [], []>} : vector<8x64xbf16>, vector<64x128xbf16>, vector<8x128xf32> -> vector<8x128xf32>
    %c1_36 = arith.constant 1 : index
    %c0_37 = arith.constant 0 : index
    %c0_38 = arith.constant 0 : index
    %59 = vector.load %arg6[%c1_36, %c0_37, %c0_38] : memref<2x1x128xf32, #tpu.memory_space<vmem>>, vector<1x1x128xf32>
    %60 = vector.shape_cast %59 : vector<1x1x128xf32> to vector<1x128xf32>
    %61 = vector.broadcast %60 : vector<1x128xf32> to vector<8x128xf32>
    %62 = arith.addf %58, %61 : vector<8x128xf32>
    %cst_39 = arith.constant 5.000000e-01 : f32
    %63 = vector.broadcast %cst_39 : f32 to vector<8x128xf32>
    %64 = arith.mulf %63, %62 : vector<8x128xf32>
    %65 = math.tanh %64 : vector<8x128xf32>
    %cst_40 = arith.constant 5.000000e-01 : f32
    %66 = vector.broadcast %cst_40 : f32 to vector<8x128xf32>
    %67 = arith.mulf %66, %65 : vector<8x128xf32>
    %cst_41 = arith.constant 5.000000e-01 : f32
    %68 = vector.broadcast %cst_41 : f32 to vector<8x128xf32>
    %69 = arith.addf %67, %68 : vector<8x128xf32>
    %70 = math.tanh %62 : vector<8x128xf32>
    %71 = tpu.iota {dimensions = array<i32: 1>} : vector<8x128xi32>
    %c64_i32_42 = arith.constant 64 : i32
    %72 = vector.broadcast %c64_i32_42 : i32 to vector<8x128xi32>
    %73 = arith.cmpi sge, %71, %72 : vector<8x128xi32>
    %c96_i32_43 = arith.constant 96 : i32
    %74 = vector.broadcast %c96_i32_43 : i32 to vector<8x128xi32>
    %75 = arith.cmpi slt, %71, %74 : vector<8x128xi32>
    %76 = arith.andi %73, %75 : vector<8x128xi1>
    %77 = arith.select %76, %70, %69 : vector<8x128xi1>, vector<8x128xf32>
    %78 = vector.extract_strided_slice %77 {offsets = [0, 0], sizes = [8, 32], strides = [1, 1]} : vector<8x128xf32> to vector<8x32xf32>
    %79 = vector.extract_strided_slice %77 {offsets = [0, 32], sizes = [8, 32], strides = [1, 1]} : vector<8x128xf32> to vector<8x32xf32>
    %80 = vector.extract_strided_slice %77 {offsets = [0, 64], sizes = [8, 32], strides = [1, 1]} : vector<8x128xf32> to vector<8x32xf32>
    %81 = vector.extract_strided_slice %77 {offsets = [0, 96], sizes = [8, 32], strides = [1, 1]} : vector<8x128xf32> to vector<8x32xf32>
    %82 = arith.mulf %79, %53 : vector<8x32xf32>
    %83 = arith.mulf %78, %80 : vector<8x32xf32>
    %84 = arith.addf %82, %83 : vector<8x32xf32>
    %85 = math.tanh %84 : vector<8x32xf32>
    %86 = arith.mulf %81, %85 : vector<8x32xf32>
    %c1_44 = arith.constant 1 : index
    %c0_45 = arith.constant 0 : index
    %c0_46 = arith.constant 0 : index
    %87 = vector.load %arg10[%c1_44, %c0_45, %c0_46] : memref<2x8x32xf32, #tpu.memory_space<vmem>>, vector<1x8x32xf32>
    %88 = vector.shape_cast %87 : vector<1x8x32xf32> to vector<8x32xf32>
    %89 = vector.shape_cast %86 : vector<8x32xf32> to vector<1x8x32xf32>
    tpu.vector_store %arg10[%c1_44, %c0_45, %c0_46], %89 {strides = array<i32>} : memref<2x8x32xf32, #tpu.memory_space<vmem>>, vector<1x8x32xf32>,
    %c1_47 = arith.constant 1 : index
    %c0_48 = arith.constant 0 : index
    %c0_49 = arith.constant 0 : index
    %90 = vector.load %arg11[%c1_47, %c0_48, %c0_49] : memref<2x8x32xf32, #tpu.memory_space<vmem>>, vector<1x8x32xf32>
    %91 = vector.shape_cast %90 : vector<1x8x32xf32> to vector<8x32xf32>
    %92 = vector.shape_cast %84 : vector<8x32xf32> to vector<1x8x32xf32>
    tpu.vector_store %arg11[%c1_47, %c0_48, %c0_49], %92 {strides = array<i32>} : memref<2x8x32xf32, #tpu.memory_space<vmem>>, vector<1x8x32xf32>,
    %93 = arith.truncf %86 : vector<8x32xf32> to vector<8x32xbf16>
    %c0_50 = arith.constant 0 : index
    %c0_51 = arith.constant 0 : index
    %94 = vector.load %arg7[%c0_50, %c0_51] : memref<32x16xbf16, #tpu.memory_space<vmem>>, vector<32x16xbf16>
    %cst_52 = arith.constant dense<0.000000e+00> : vector<8x16xf32>
    %95 = tpu.matmul %93, %94, %cst_52 {dimension_numbers = #tpu.dot_dimension_numbers<[1], [0], [0], [1], [0, 0, 1, 1], [], []>} : vector<8x32xbf16>, vector<32x16xbf16>, vector<8x16xf32> -> vector<8x16xf32>
    %c0_53 = arith.constant 0 : index
    %c0_54 = arith.constant 0 : index
    %96 = vector.load %arg8[%c0_53, %c0_54] : memref<1x16xf32, #tpu.memory_space<vmem>>, vector<1x16xf32>
    %97 = vector.broadcast %96 : vector<1x16xf32> to vector<8x16xf32>
    %98 = arith.addf %95, %97 : vector<8x16xf32>
    %c0_55 = arith.constant 0 : index
    %c0_56 = arith.constant 0 : index
    %99 = vector.load %arg9[%c0_55, %c0_56] : memref<8x16xf32, #tpu.memory_space<vmem>>, vector<8x16xf32>
    tpu.vector_store %arg9[%c0_55, %c0_56], %98 {strides = array<i32>} : memref<8x16xf32, #tpu.memory_space<vmem>>, vector<8x16xf32>,
    return
  }
}

</mosaic_0001>

<llo_original>
// kernel: decoder_forward.1
$region0: #{decoder_forward.1}
  #allocation0 [shape = 'u32[]', space=smem, size = 0x4, offset = 0x4, fixed_abs, tag = 'smem constant byte address 0x4 - core index']
  #allocation1 [shape = 'u32[144,128]{1,0:T(1,128)}', space=vmem, size = 0x12000, scoped, tag = 'internal scratch']
  %s0 = inlined_call_operand.vmem [shape: f32[8,16], index: 0, kind: input, shape index: {}]
  %s1 = inlined_call_operand.hbm [shape: f32[2,8,32], index: 1, kind: input, shape index: {}, may-alias: {1,10}]
  %s2 = inlined_call_operand.hbm [shape: f32[2,8,32], index: 2, kind: input, shape index: {}, may-alias: {2,11}]
  %s3 = inlined_call_operand.hbm [shape: bf16[16,32], index: 3, kind: input, shape index: {}]
  %s4 = inlined_call_operand.vmem [shape: f32[1,32], index: 4, kind: input, shape index: {}]
  %s5 = inlined_call_operand.vmem [shape: bf16[2,64,128], index: 5, kind: input, shape index: {}]
  %s6 = inlined_call_operand.hbm [shape: f32[2,1,128], index: 6, kind: input, shape index: {}]
  %s7 = inlined_call_operand.vmem [shape: bf16[32,16], index: 7, kind: input, shape index: {}]
  %s8 = inlined_call_operand.hbm [shape: f32[1,16], index: 8, kind: input, shape index: {}]
  %s9 = inlined_call_operand.hbm [shape: f32[8,16], index: 9, kind: output, shape index: {0}]
  %s10 = inlined_call_operand.hbm [shape: f32[2,8,32], index: 10, kind: output, shape index: {1}, may-alias: {1,10}]
  %s11 = inlined_call_operand.hbm [shape: f32[2,8,32], index: 11, kind: output, shape index: {2}, may-alias: {2,11}]
  %12 = xla_tuple %s9, %s10, %s11
  %s13 = sld [smem:[#allocation0]]
  $region82: #{decoder_forward.1} parent=0
    _
  %s15 = ssub.s32 1, %s13
  %s16 = scalar_select 0, %s15, %s13
  $region1: #{decoder_forward.1} parent=0
    #allocation2 [shape = 'u8[8192]{0}', space=vmem, size = 0x2000, scoped, tag = 'input window, operand 1, single buffered']
    #allocation3 [shape = 's32[1]{0}', space=sflag, size = 0x4, scoped, tag = 'scoped memory for decoder_forward.1']
    #allocation4 [shape = 's32[1]{0}', space=sflag, size = 0x4, scoped, tag = 'scoped memory for decoder_forward.1']
    #allocation5 [shape = 'u8[8192]{0}', space=vmem, size = 0x2000, scoped, tag = 'input window, operand 2, single buffered']
    #allocation6 [shape = 's32[1]{0}', space=sflag, size = 0x4, scoped, tag = 'scoped memory for decoder_forward.1']
    #allocation7 [shape = 'u8[4096]{0}', space=vmem, size = 0x1000, scoped, tag = 'input window, operand 3, single buffered']
    #allocation8 [shape = 'u8[1024]{0}', space=vmem, size = 0x400, scoped, tag = 'input window, operand 6, single buffered']
    #allocation9 [shape = 's32[1]{0}', space=sflag, size = 0x4, scoped, tag = 'scoped memory for decoder_forward.1']
    #allocation10 [shape = 'u8[512]{0}', space=vmem, size = 0x400, scoped, tag = 'input window, operand 8, single buffered']
    #allocation11 [shape = 'u8[4096]{0}', space=vmem, size = 0x1000, scoped, tag = 'output window, operand 0, single buffered']
    #allocation12 [shape = 'u8[8192]{0}', space=vmem, size = 0x2000, scoped, tag = 'output window, operand 1, single buffered']
    #allocation13 [shape = 's32[1]{0}', space=sflag, size = 0x4, scoped, tag = 'scoped memory for decoder_forward.1']
    #allocation14 [shape = 'u8[8192]{0}', space=vmem, size = 0x2000, scoped, tag = 'output window, operand 2, single buffered']
    %17 = vsyncpa [#allocation3], 0
    %18 = vsyncpa [#allocation6], 0
    %19 = vsyncpa [#allocation9], 0
    %20 = vsyncpa [#allocation4], 0
    %21 = vsyncpa [#allocation13], 0
    // Predicated region
    $region2: #{decoder_forward.1} parent=1 // pred_check
      _
    $region3: #{decoder_forward.1} parent=1 // pred_check_branch
      %23 = sbr.rel (0) target = $region5
    $region4: #{decoder_forward.1} parent=1 // pred_region
      _
    $region5: #{decoder_forward.1} parent=1 // pred_fallthru
      _
    // Predicated region
    $region6: #{decoder_forward.1} parent=1 // pred_check
      _
    $region7: #{decoder_forward.1} parent=1 // pred_check_branch
      %25 = sbr.rel (0) target = $region9
    $region8: #{decoder_forward.1} parent=1 // pred_region
      %s27 = ssub.s32 256, 256
      %28 = vsyncadd [#allocation3], %s27
      %s29 = sshll.u32 [#allocation2], 4
      %s30 = int_to_ptr.vmem [resolvable:$true] %s29
      %35 = dma.hbm_to_vmem [thread:$0]  %s1, 256, %s30, [#allocation3], 128, 128, 8
    $region9: #{decoder_forward.1} parent=1 // pred_fallthru
      _
    // Predicated region
    $region10: #{decoder_forward.1} parent=1 // pred_check
      _
    $region11: #{decoder_forward.1} parent=1 // pred_check_branch
      %37 = sbr.rel (0) target = $region13
    $region12: #{decoder_forward.1} parent=1 // pred_region
      %s39 = ssub.s32 256, 256
      %40 = vsyncadd [#allocation6], %s39
      %s41 = sshll.u32 [#allocation5], 4
      %s42 = int_to_ptr.vmem [resolvable:$true] %s41
      %47 = dma.hbm_to_vmem [thread:$0]  %s2, 256, %s42, [#allocation6], 128, 128, 8
    $region13: #{decoder_forward.1} parent=1 // pred_fallthru
      _
    // Predicated region
    $region14: #{decoder_forward.1} parent=1 // pred_check
      _
    $region15: #{decoder_forward.1} parent=1 // pred_check_branch
      %49 = sbr.rel (0) target = $region17
    $region16: #{decoder_forward.1} parent=1 // pred_region
      %s51 = ssub.s32 128, 128
      %52 = vsyncadd [#allocation6], %s51
      %s53 = sshll.u32 [#allocation7], 4
      %s54 = int_to_ptr.vmem [resolvable:$true] %s53
      %59 = dma.hbm_to_vmem [thread:$0]  %s3, 128, %s54, [#allocation6], 64, 64, 4
    $region17: #{decoder_forward.1} parent=1 // pred_fallthru
      _
    // Predicated region
    $region18: #{decoder_forward.1} parent=1 // pred_check
      _
    $region19: #{decoder_forward.1} parent=1 // pred_check_branch
      %61 = sbr.rel (0) target = $region21
    $region20: #{decoder_forward.1} parent=1 // pred_region
      _
    $region21: #{decoder_forward.1} parent=1 // pred_fallthru
      _
    // Predicated region
    $region22: #{decoder_forward.1} parent=1 // pred_check
      _
    $region23: #{decoder_forward.1} parent=1 // pred_check_branch
      %63 = sbr.rel (0) target = $region25
    $region24: #{decoder_forward.1} parent=1 // pred_region
      _
    $region25: #{decoder_forward.1} parent=1 // pred_fallthru
      _
    // Predicated region
    $region26: #{decoder_forward.1} parent=1 // pred_check
      _
    $region27: #{decoder_forward.1} parent=1 // pred_check_branch
      %65 = sbr.rel (0) target = $region29
    $region28: #{decoder_forward.1} parent=1 // pred_region
      %s67 = ssub.s32 32, 32
      %68 = vsyncadd [#allocation9], %s67
      %s69 = sshll.u32 [#allocation8], 4
      %s70 = int_to_ptr.vmem [resolvable:$true] %s69
      %75 = dma.hbm_to_vmem [thread:$0]  %s6, 32, %s70, [#allocation9], 16, 16, 1
    $region29: #{decoder_forward.1} parent=1 // pred_fallthru
      _
    // Predicated region
    $region30: #{decoder_forward.1} parent=1 // pred_check
      _
    $region31: #{decoder_forward.1} parent=1 // pred_check_branch
      %77 = sbr.rel (0) target = $region33
    $region32: #{decoder_forward.1} parent=1 // pred_region
      _
    $region33: #{decoder_forward.1} parent=1 // pred_fallthru
      _
    // Predicated region
    $region34: #{decoder_forward.1} parent=1 // pred_check
      _
    $region35: #{decoder_forward.1} parent=1 // pred_check_branch
      %79 = sbr.rel (0) target = $region37
    $region36: #{decoder_forward.1} parent=1 // pred_region
      %s81 = ssub.s32 16, 16
      %82 = vsyncadd [#allocation9], %s81
      %s84 = sshll.u32 [#allocation10], 4
      %s85 = int_to_ptr.vmem [resolvable:$true] %s84
      %87 = dma.hbm_to_vmem [thread:$0]  %s8, 16, %s85, [#allocation9]
    $region37: #{decoder_forward.1} parent=1 // pred_fallthru
      _
    // Predicated region
    $region38: #{decoder_forward.1} parent=1 // pred_check
      _
    $region39: #{decoder_forward.1} parent=1 // pred_check_branch
      %89 = sbr.rel (0) target = $region41
    $region40: #{decoder_forward.1} parent=1 // pred_region
      %90 = dma.done [#allocation3], 256
    $region41: #{decoder_forward.1} parent=1 // pred_fallthru
      _
    // Predicated region
    $region42: #{decoder_forward.1} parent=1 // pred_check
      _
    $region43: #{decoder_forward.1} parent=1 // pred_check_branch
      %92 = sbr.rel (0) target = $region45
    $region44: #{decoder_forward.1} parent=1 // pred_region
      %93 = dma.done [#allocation6], 256
    $region45: #{decoder_forward.1} parent=1 // pred_fallthru
      _
    // Predicated region
    $region46: #{decoder_forward.1} parent=1 // pred_check
      _
    $region47: #{decoder_forward.1} parent=1 // pred_check_branch
      %95 = sbr.rel (0) target = $region49
    $region48: #{decoder_forward.1} parent=1 // pred_region
      %96 = dma.done [#allocation6], 128
    $region49: #{decoder_forward.1} parent=1 // pred_fallthru
      _
    // Predicated region
    $region50: #{decoder_forward.1} parent=1 // pred_check
      _
    $region51: #{decoder_forward.1} parent=1 // pred_check_branch
      %98 = sbr.rel (0) target = $region53
    $region52: #{decoder_forward.1} parent=1 // pred_region
      %99 = dma.done [#allocation9], 32
    $region53: #{decoder_forward.1} parent=1 // pred_fallthru
      _
    // Predicated region
    $region54: #{decoder_forward.1} parent=1 // pred_check
      _
    $region55: #{decoder_forward.1} parent=1 // pred_check_branch
      %101 = sbr.rel (0) target = $region57
    $region56: #{decoder_forward.1} parent=1 // pred_region
      %102 = dma.done [#allocation9], 16
    $region57: #{decoder_forward.1} parent=1 // pred_fallthru
      _
    %v104 = vld [vmem:[%s0] sm:$0xff]
    %v105 = vpack.c.bf16 %v104, %v104
    %v106 = vld [vmem:[#allocation7] sm:$0xf]
    %v107 = vld [vmem:[#allocation7 + $0x4] sm:$0xf]
    %v108 = vld [vmem:[%s4] sm:$0x1]
    %v110 = vlaneseq
    %v111 = vshrl.u32 %v110, 7
    %v112 = vsub.s32 0, %v111
    %v113 = vrot.slane %v108, %v112
    %v117 = vunpack.c.l.b16 %v106
    %v118 = vunpack.c.l.b16 %v107
    %v119 = vpack.c.b16 %v118, %v117
    %vm121 = vcmask 130048
    %v123 = vsel %vm121, %v105, 0
    %125 = vmatprep.subr.bf16.mxu0 0
    %126 = vmatpush1.bf16.msra.mxu0 0
    %127 = vmatprep.subr.bf16.mxu0 0
    %128 = vmatpush1.bf16.msra.mxu0 0
    %129 = vmatprep.subr.bf16.mxu0 0
    %130 = vmatpush1.bf16.msra.mxu0 0
    %131 = vmatprep.subr.bf16.mxu0 0
    %132 = vmatpush1.bf16.msra.mxu0 0
    %133 = vmatprep.subr.bf16.mxu0 0
    %134 = vmatpush1.bf16.msra.mxu0 0
    %135 = vmatprep.subr.bf16.mxu0 0
    %136 = vmatpush1.bf16.msra.mxu0 0
    %137 = vmatprep.subr.bf16.mxu0 0
    %138 = vmatpush1.bf16.msra.mxu0 0
    %139 = vmatprep.subr.bf16.mxu0 0
    %140 = vmatpush1.bf16.msra.mxu0 %v119
    %141 = vmatprep.subr.bf16.mxu0 0
    %142 = vmatpush2.bf16.msra.mxu0 0
    %143 = vmatprep.subr.bf16.mxu0 0
    %144 = vmatpush2.bf16.msra.mxu0 0
    %145 = vmatprep.subr.bf16.mxu0 0
    %146 = vmatpush2.bf16.msra.mxu0 0
    %147 = vmatprep.subr.bf16.mxu0 0
    %148 = vmatpush2.bf16.msra.mxu0 0
    %149 = vmatprep.subr.bf16.mxu0 0
    %150 = vmatpush2.bf16.msra.mxu0 0
    %151 = vmatprep.subr.bf16.mxu0 0
    %152 = vmatpush2.bf16.msra.mxu0 0
    %153 = vmatprep.subr.bf16.mxu0 0
    %154 = vmatpush2.bf16.msra.mxu0 0
    %155 = vmatprep.subr.bf16.mxu0 0
    %156 = vmatpush2.bf16.msra.mxu0 0
    %157 = vmatprep.mubr.bf16.mxu0 0
    %158 = vmatmul.mubr.bf16.gmra.mxu0 %v123
    %v159 = vpop.f32.mrf.mxu0
    %v160 = vadd.f32 %v113, %v159
    %v161 = vpop.f32.mrf.mxu0
    %v162 = vpop.f32.mrf.mxu0
    %v163 = vpop.f32.mrf.mxu0
    %164 = vdwg.mxu0
    %v165 = vld [vmem:[#allocation2] sm:$0xff]
    %v166 = vld [vmem:[#allocation5] sm:$0xff]
    %168 = vrot.lane.b32.xlu0 %v165, 32
    %v169 = vpop.permute.xlu0 %168
    %vm171 = vcmask 261120
    %v172 = vsel %vm171, %v160, %v169
    %v173 = vpack.c.bf16 %v172, %v172
    %v174 = vld [vmem:[%s5] sm:$0xf]
    %v175 = vld [vmem:[%s5 + $0x4] sm:$0xf]
    %v176 = vld [vmem:[%s5 + $0x8] sm:$0xf]
    %v177 = vld [vmem:[%s5 + $0xc] sm:$0xf]
    %v178 = vld [vmem:[%s5 + $0x10] sm:$0xf]
    %v179 = vld [vmem:[%s5 + $0x14] sm:$0xf]
    %v180 = vld [vmem:[%s5 + $0x18] sm:$0xf]
    %v181 = vld [vmem:[%s5 + $0x1c] sm:$0xf]
    %v182 = vld [vmem:[#allocation8] sm:$0x1]
    %v184 = vlaneseq
    %v185 = vshrl.u32 %v184, 7
    %v186 = vsub.s32 0, %v185
    %v187 = vrot.slane %v182, %v186
    %v197 = vunpack.c.l.b16 %v174
    %v198 = vunpack.c.l.b16 %v175
    %v199 = vunpack.c.l.b16 %v176
    %v200 = vunpack.c.l.b16 %v177
    %v201 = vunpack.c.l.b16 %v178
    %v202 = vunpack.c.l.b16 %v179
    %v203 = vunpack.c.l.b16 %v180
    %v204 = vunpack.c.l.b16 %v181
    %v205 = vpack.c.b16 %v198, %v197
    %v206 = vpack.c.b16 %v200, %v199
    %v207 = vpack.c.b16 %v202, %v201
    %v208 = vpack.c.b16 %v204, %v203
    %vm213 = vcmask 523264
    %v215 = vsel %vm213, %v173, 0
    %217 = vmatprep.subr.bf16.mxu0 0
    %218 = vmatpush1.bf16.msra.mxu0 0
    %219 = vmatprep.subr.bf16.mxu0 0
    %220 = vmatpush1.bf16.msra.mxu0 0
    %221 = vmatprep.subr.bf16.mxu0 0
    %222 = vmatpush1.bf16.msra.mxu0 0
    %223 = vmatprep.subr.bf16.mxu0 0
    %224 = vmatpush1.bf16.msra.mxu0 0
    %225 = vmatprep.subr.bf16.mxu0 0
    %226 = vmatpush1.bf16.msra.mxu0 %v208
    %227 = vmatprep.subr.bf16.mxu0 0
    %228 = vmatpush1.bf16.msra.mxu0 %v207
    %229 = vmatprep.subr.bf16.mxu0 0
    %230 = vmatpush1.bf16.msra.mxu0 %v206
    %231 = vmatprep.subr.bf16.mxu0 0
    %232 = vmatpush1.bf16.msra.mxu0 %v205
    %233 = vmatprep.subr.bf16.mxu0 0
    %234 = vmatpush2.bf16.msra.mxu0 0
    %235 = vmatprep.subr.bf16.mxu0 0
    %236 = vmatpush2.bf16.msra.mxu0 0
    %237 = vmatprep.subr.bf16.mxu0 0
    %238 = vmatpush2.bf16.msra.mxu0 0
    %239 = vmatprep.subr.bf16.mxu0 0
    %240 = vmatpush2.bf16.msra.mxu0 0
    %241 = vmatprep.subr.bf16.mxu0 0
    %242 = vmatpush2.bf16.msra.mxu0 0
    %243 = vmatprep.subr.bf16.mxu0 0
    %244 = vmatpush2.bf16.msra.mxu0 0
    %245 = vmatprep.subr.bf16.mxu0 0
    %246 = vmatpush2.bf16.msra.mxu0 0
    %247 = vmatprep.subr.bf16.mxu0 0
    %248 = vmatpush2.bf16.msra.mxu0 0
    %249 = vmatprep.mubr.bf16.mxu0 0
    %250 = vmatmul.mubr.bf16.gmra.mxu0 %v215
    %v251 = vpop.f32.mrf.mxu0
    %v252 = vadd.f32 %v187, %v251
    %v253 = vpop.f32.mrf.mxu0
    %v254 = vpop.f32.mrf.mxu0
    %v255 = vpop.f32.mrf.mxu0
    %256 = vdwg.mxu0
    %v257 = vmul.f32 %v252, 0.5
    %v258 = vtanh.pop %v257
    %v259 = vmul.f32 %v258, 0.5
    %v260 = vadd.f32 %v259, 0.5
    %v261 = vtanh.pop %v252
    %v262 = vlaneseq
    %v263 = vand.u32 %v262, 127
    %vm264 = vcmp.ge.s32.totalorder %v263, 64
    %vm265 = vcmp.lt.s32.totalorder %v263, 96
    %vm266 = vmand %vm264, %vm265
    %v267 = vsel %vm266, %v261, %v260
    %269 = vrot.lane.b32.xlu0 %v166, 32
    %v270 = vpop.permute.xlu0 %269
    %v272 = vmul.f32 %v267, %v270
    %274 = vrot.lane.b32.xlu0 %v267, 64
    %v275 = vpop.permute.xlu0 %274
    %v277 = vmul.f32 %v267, %v275
    %279 = vrot.lane.b32.xlu0 %v277, 32
    %v280 = vpop.permute.xlu0 %279
    %v282 = vadd.f32 %v272, %v280
    %v283 = vtanh.pop %v282
    %285 = vrot.lane.b32.xlu0 %v283, 64
    %v286 = vpop.permute.xlu0 %285
    %v288 = vmul.f32 %v267, %v286
    %290 = vrot.lane.b32.xlu0 %v288, 32
    %v291 = vpop.permute.xlu0 %290
    %293 = vst.msk [vmem:[#allocation12] sm:$0xff] %vm171, %v291
    %295 = vrot.lane.b32.xlu0 %v282, 96
    %v296 = vpop.permute.xlu0 %295
    %298 = vst.msk [vmem:[#allocation14] sm:$0xff] %vm171, %v296
    %s299 = scalar_lea.vmem [#allocation2], 8
    %v300 = vld [vmem:[%s299] sm:$0xff]
    %s301 = scalar_lea.vmem [#allocation5], 8
    %v302 = vld [vmem:[%s301] sm:$0xff]
    %304 = vrot.lane.b32.xlu0 %v300, 32
    %v305 = vpop.permute.xlu0 %304
    %v307 = vsel %vm171, %v291, %v305
    %v308 = vpack.c.bf16 %v307, %v307
    %s309 = scalar_lea.vmem %s5, 32
    %v310 = vld [vmem:[%s309] sm:$0xf]
    %v311 = vld [vmem:[%s309 + $0x4] sm:$0xf]
    %v312 = vld [vmem:[%s309 + $0x8] sm:$0xf]
    %v313 = vld [vmem:[%s309 + $0xc] sm:$0xf]
    %v314 = vld [vmem:[%s309 + $0x10] sm:$0xf]
    %v315 = vld [vmem:[%s309 + $0x14] sm:$0xf]
    %v316 = vld [vmem:[%s309 + $0x18] sm:$0xf]
    %v317 = vld [vmem:[%s309 + $0x1c] sm:$0xf]
    %s318 = scalar_lea.vmem [#allocation8], 1
    %v319 = vld [vmem:[%s318] sm:$0x1]
    %v321 = vlaneseq
    %v322 = vshrl.u32 %v321, 7
    %v323 = vsub.s32 0, %v322
    %v324 = vrot.slane %v319, %v323
    %v334 = vunpack.c.l.b16 %v310
    %v335 = vunpack.c.l.b16 %v311
    %v336 = vunpack.c.l.b16 %v312
    %v337 = vunpack.c.l.b16 %v313
    %v338 = vunpack.c.l.b16 %v314
    %v339 = vunpack.c.l.b16 %v315
    %v340 = vunpack.c.l.b16 %v316
    %v341 = vunpack.c.l.b16 %v317
    %v342 = vpack.c.b16 %v335, %v334
    %v343 = vpack.c.b16 %v337, %v336
    %v344 = vpack.c.b16 %v339, %v338
    %v345 = vpack.c.b16 %v341, %v340
    %v351 = vsel %vm213, %v308, 0
    %353 = vmatprep.subr.bf16.mxu0 0
    %354 = vmatpush1.bf16.msra.mxu0 0
    %355 = vmatprep.subr.bf16.mxu0 0
    %356 = vmatpush1.bf16.msra.mxu0 0
    %357 = vmatprep.subr.bf16.mxu0 0
    %358 = vmatpush1.bf16.msra.mxu0 0
    %359 = vmatprep.subr.bf16.mxu0 0
    %360 = vmatpush1.bf16.msra.mxu0 0
    %361 = vmatprep.subr.bf16.mxu0 0
    %362 = vmatpush1.bf16.msra.mxu0 %v345
    %363 = vmatprep.subr.bf16.mxu0 0
    %364 = vmatpush1.bf16.msra.mxu0 %v344
    %365 = vmatprep.subr.bf16.mxu0 0
    %366 = vmatpush1.bf16.msra.mxu0 %v343
    %367 = vmatprep.subr.bf16.mxu0 0
    %368 = vmatpush1.bf16.msra.mxu0 %v342
    %369 = vmatprep.subr.bf16.mxu0 0
    %370 = vmatpush2.bf16.msra.mxu0 0
    %371 = vmatprep.subr.bf16.mxu0 0
    %372 = vmatpush2.bf16.msra.mxu0 0
    %373 = vmatprep.subr.bf16.mxu0 0
    %374 = vmatpush2.bf16.msra.mxu0 0
    %375 = vmatprep.subr.bf16.mxu0 0
    %376 = vmatpush2.bf16.msra.mxu0 0
    %377 = vmatprep.subr.bf16.mxu0 0
    %378 = vmatpush2.bf16.msra.mxu0 0
    %379 = vmatprep.subr.bf16.mxu0 0
    %380 = vmatpush2.bf16.msra.mxu0 0
    %381 = vmatprep.subr.bf16.mxu0 0
    %382 = vmatpush2.bf16.msra.mxu0 0
    %383 = vmatprep.subr.bf16.mxu0 0
    %384 = vmatpush2.bf16.msra.mxu0 0
    %385 = vmatprep.mubr.bf16.mxu0 0
    %386 = vmatmul.mubr.bf16.gmra.mxu0 %v351
    %v387 = vpop.f32.mrf.mxu0
    %v388 = vadd.f32 %v324, %v387
    %v389 = vpop.f32.mrf.mxu0
    %v390 = vpop.f32.mrf.mxu0
    %v391 = vpop.f32.mrf.mxu0
    %392 = vdwg.mxu0
    %v393 = vmul.f32 %v388, 0.5
    %v394 = vtanh.pop %v393
    %v395 = vmul.f32 %v394, 0.5
    %v396 = vadd.f32 %v395, 0.5
    %v397 = vtanh.pop %v388
    %v398 = vsel %vm266, %v397, %v396
    %400 = vrot.lane.b32.xlu0 %v302, 32
    %v401 = vpop.permute.xlu0 %400
    %v403 = vmul.f32 %v398, %v401
    %405 = vrot.lane.b32.xlu0 %v398, 64
    %v406 = vpop.permute.xlu0 %405
    %v408 = vmul.f32 %v398, %v406
    %410 = vrot.lane.b32.xlu0 %v408, 32
    %v411 = vpop.permute.xlu0 %410
    %v413 = vadd.f32 %v403, %v411
    %v414 = vtanh.pop %v413
    %416 = vrot.lane.b32.xlu0 %v414, 64
    %v417 = vpop.permute.xlu0 %416
    %v419 = vmul.f32 %v398, %v417
    %421 = vrot.lane.b32.xlu0 %v419, 32
    %v422 = vpop.permute.xlu0 %421
    %s424 = scalar_lea.vmem [#allocation12], 8
    %425 = vst.msk [vmem:[%s424] sm:$0xff] %vm171, %v422
    %427 = vrot.lane.b32.xlu0 %v413, 96
    %v428 = vpop.permute.xlu0 %427
    %s430 = scalar_lea.vmem [#allocation14], 8
    %431 = vst.msk [vmem:[%s430] sm:$0xff] %vm171, %v428
    %v432 = vpack.c.bf16 %v419, %v419
    %v433 = vld [vmem:[%s7] sm:$0xf]
    %v434 = vld [vmem:[%s7 + $0x4] sm:$0xf]
    %v435 = vld [vmem:[%s7 + $0x8] sm:$0xf]
    %v436 = vld [vmem:[%s7 + $0xc] sm:$0xf]
    %v437 = vld [vmem:[#allocation10] sm:$0x1]
    %v439 = vlaneseq
    %v440 = vshrl.u32 %v439, 7
    %v441 = vsub.s32 0, %v440
    %v442 = vrot.slane %v437, %v441
    %445 = vrot.lane.b32.xlu0 %v432, 32
    %v446 = vpop.permute.xlu0 %445
    %v451 = vunpack.c.l.b16 %v433
    %v452 = vunpack.c.l.b16 %v434
    %v453 = vunpack.c.l.b16 %v435
    %v454 = vunpack.c.l.b16 %v436
    %v455 = vpack.c.b16 %v452, %v451
    %v456 = vpack.c.b16 %v454, %v453
    %v460 = vsel %vm171, %v446, 0
    %462 = vmatprep.subr.bf16.mxu0 0
    %463 = vmatpush1.bf16.msra.mxu0 0
    %464 = vmatprep.subr.bf16.mxu0 0
    %465 = vmatpush1.bf16.msra.mxu0 0
    %466 = vmatprep.subr.bf16.mxu0 0
    %467 = vmatpush1.bf16.msra.mxu0 0
    %468 = vmatprep.subr.bf16.mxu0 0
    %469 = vmatpush1.bf16.msra.mxu0 0
    %470 = vmatprep.subr.bf16.mxu0 0
    %471 = vmatpush1.bf16.msra.mxu0 0
    %472 = vmatprep.subr.bf16.mxu0 0
    %473 = vmatpush1.bf16.msra.mxu0 0
    %474 = vmatprep.subr.bf16.mxu0 0
    %475 = vmatpush1.bf16.msra.mxu0 %v456
    %476 = vmatprep.subr.bf16.mxu0 0
    %477 = vmatpush1.bf16.msra.mxu0 %v455
    %478 = vmatprep.subr.bf16.mxu0 0
    %479 = vmatpush2.bf16.msra.mxu0 0
    %480 = vmatprep.subr.bf16.mxu0 0
    %481 = vmatpush2.bf16.msra.mxu0 0
    %482 = vmatprep.subr.bf16.mxu0 0
    %483 = vmatpush2.bf16.msra.mxu0 0
    %484 = vmatprep.subr.bf16.mxu0 0
    %485 = vmatpush2.bf16.msra.mxu0 0
    %486 = vmatprep.subr.bf16.mxu0 0
    %487 = vmatpush2.bf16.msra.mxu0 0
    %488 = vmatprep.subr.bf16.mxu0 0
    %489 = vmatpush2.bf16.msra.mxu0 0
    %490 = vmatprep.subr.bf16.mxu0 0
    %491 = vmatpush2.bf16.msra.mxu0 0
    %492 = vmatprep.subr.bf16.mxu0 0
    %493 = vmatpush2.bf16.msra.mxu0 0
    %494 = vmatprep.mubr.bf16.mxu0 0
    %495 = vmatmul.mubr.bf16.gmra.mxu0 %v460
    %v496 = vpop.f32.mrf.mxu0
    %v497 = vadd.f32 %v442, %v496
    %v498 = vpop.f32.mrf.mxu0
    %v499 = vpop.f32.mrf.mxu0
    %v500 = vpop.f32.mrf.mxu0
    %501 = vdwg.mxu0
    %502 = vst.msk [vmem:[#allocation11] sm:$0xff] %vm121, %v497
    // Predicated region
    $region58: #{decoder_forward.1} parent=1 // pred_check
      _
    $region59: #{decoder_forward.1} parent=1 // pred_check_branch
      %504 = sbr.rel (0) target = $region61
    $region60: #{decoder_forward.1} parent=1 // pred_region
      %s506 = ssub.s32 128, 128
      %507 = vsyncadd [#allocation4], %s506
      %s509 = sshll.u32 [#allocation11], 4
      %s510 = int_to_ptr.vmem [resolvable:$true] %s509
      %512 = dma.vmem_to_hbm [thread:$0]  %s510, 128, %s9, [#allocation4]
    $region61: #{decoder_forward.1} parent=1 // pred_fallthru
      _
    // Predicated region
    $region62: #{decoder_forward.1} parent=1 // pred_check
      _
    $region63: #{decoder_forward.1} parent=1 // pred_check_branch
      %514 = sbr.rel (0) target = $region65
    $region64: #{decoder_forward.1} parent=1 // pred_region
      %s516 = ssub.s32 256, 256
      %517 = vsyncadd [#allocation13], %s516
      %s518 = sshll.u32 [#allocation12], 4
      %s519 = int_to_ptr.vmem [resolvable:$true] %s518
      %524 = dma.vmem_to_hbm [thread:$0]  %s519, 256, %s10, [#allocation13], 128, 128, 8
    $region65: #{decoder_forward.1} parent=1 // pred_fallthru
      _
    // Predicated region
    $region66: #{decoder_forward.1} parent=1 // pred_check
      _
    $region67: #{decoder_forward.1} parent=1 // pred_check_branch
      %526 = sbr.rel (0) target = $region69
    $region68: #{decoder_forward.1} parent=1 // pred_region
      %s528 = ssub.s32 256, 256
      %529 = vsyncadd [#allocation13], %s528
      %s530 = sshll.u32 [#allocation14], 4
      %s531 = int_to_ptr.vmem [resolvable:$true] %s530
      %536 = dma.vmem_to_hbm [thread:$0]  %s531, 256, %s11, [#allocation13], 128, 128, 8
    $region69: #{decoder_forward.1} parent=1 // pred_fallthru
      _
    // Predicated region
    $region70: #{decoder_forward.1} parent=1 // pred_check
      _
    $region71: #{decoder_forward.1} parent=1 // pred_check_branch
      %538 = sbr.rel (0) target = $region73
    $region72: #{decoder_forward.1} parent=1 // pred_region
      %539 = dma.done [#allocation4], 128
    $region73: #{decoder_forward.1} parent=1 // pred_fallthru
      _
    // Predicated region
    $region74: #{decoder_forward.1} parent=1 // pred_check
      _
    $region75: #{decoder_forward.1} parent=1 // pred_check_branch
      %541 = sbr.rel (0) target = $region77
    $region76: #{decoder_forward.1} parent=1 // pred_region
      %542 = dma.done [#allocation13], 256
    $region77: #{decoder_forward.1} parent=1 // pred_fallthru
      _
    // Predicated region
    $region78: #{decoder_forward.1} parent=1 // pred_check
      _
    $region79: #{decoder_forward.1} parent=1 // pred_check_branch
      %544 = sbr.rel (0) target = $region81
    $region80: #{decoder_forward.1} parent=1 // pred_region
      %545 = dma.done [#allocation13], 256
    $region81: #{decoder_forward.1} parent=1 // pred_fallthru
      _
    %546 = vsyncpa [#allocation3], 1
    %547 = vsyncpa [#allocation6], 1
    %548 = vsyncpa [#allocation9], 1
    %549 = vsyncpa [#allocation4], 1
    %550 = vsyncpa [#allocation13], 1

</llo_original>
